<compile_context>
chip_gen: v7x
topology: tpu7x:2x2x1
jax: 0.10.0
libtpu: 0.0.40
codegen_flags: <defaults>
</compile_context>

<pallas_src>
import jax
import jax.numpy as jnp
from jax import lax
from jax.experimental import pallas as pl
from jax.experimental.pallas import tpu as pltpu

# Transposed-RHS contraction (A @ B^T), the standard MXU path used by flash attention.
_TRANS_B_DIM_NUMBERS = (((1,), (1,)), ((), ()))


def critic_twin_kernel(s_ref,
                       w0_ref, b0_ref,
                       wf1_ref, bf1_ref,
                       wf2_ref,
                       wqc_ref,
                       o_ref):
    """One batch tile of the full CriticAdvTwin forward; weights stay VMEM-resident.

    All activations are (features, bt): batch in the lane axis, features in sublanes.
    """
    f32 = jnp.float32
    bf16 = jnp.bfloat16
    M = w0_ref.shape[0]

    s = s_ref[...]                                   # (bt, S)
    if s.dtype != bf16:
        s = s.astype(bf16)

    # h1^T = relu(W0 @ s^T + b0)   -- A @ B^T via transposed-RHS dot_general (MXU)
    h1 = lax.dot_general(w0_ref[...], s, _TRANS_B_DIM_NUMBERS,
                         preferred_element_type=f32) + b0_ref[...]
    h1 = jnp.maximum(h1, 0.0)                        # (M, bt) f32
    h1b = h1.astype(bf16)

    # Fused same-LHS dot: [W1 | W2[:M] | Wq[:M]] @ h1^T + [b1 | b2 | bq]
    r1 = jnp.dot(wf1_ref[...], h1b, preferred_element_type=f32) + bf1_ref[...]
    t1 = r1[:M, :]                                   # (M,  bt) dense1 pre-activation
    t2_part = r1[M:3 * M, :]                         # (2M, bt) x1's contribution to dense2
    q_part = r1[3 * M:, :]                           # (2,  bt) x1's contribution to heads (+bq)

    hs1 = jnp.clip(t1 + 3.0, 0.0, 6.0) * (1.0 / 6.0) * t1        # HardSwish
    hs1b = hs1.astype(bf16)

    # Fused same-LHS dot: [W2[M:] | Wq[M:2M]] @ hs1^T
    r2 = jnp.dot(wf2_ref[...], hs1b, preferred_element_type=f32)
    t2 = t2_part + r2[:2 * M, :]                     # (2M, bt) dense2 pre-activation
    q_part = q_part + r2[2 * M:, :]                  # + hs1's contribution to heads

    hs2 = jnp.clip(t2 + 3.0, 0.0, 6.0) * (1.0 / 6.0) * t2        # HardSwish
    hs2b = hs2.astype(bf16)

    # Fused twin heads: q^T = q_part + Wq[2M:] @ hs2^T   -> (2, bt), lane-dense store
    q = q_part + jnp.dot(wqc_ref[...], hs2b, preferred_element_type=f32)
    o_ref[...] = q


def prepare_kernel_params(params):
    """Build the transposed / fused / bf16 kernel operands (one-time, tiny)."""
    w0, b0, w1, b1, w2, b2, wq1, bq1, wq2, bq2 = params   # weights stored (in, out)
    M = w1.shape[0]
    bf16, f32 = jnp.bfloat16, jnp.float32

    wq = jnp.concatenate([wq1, wq2], axis=1)              # (4M, 2)  fused twin heads
    bq = jnp.concatenate([bq1, bq2], axis=1)              # (1, 2)

    w0k = w0.T.astype(bf16)                               # (M, S)
    b0k = b0.T.astype(f32)                                # (M, 1)

    # Fused same-LHS weights for h1:  [W1 | W2[:M] | Wq[:M]]  -> (3M+2, M)
    wf1 = jnp.concatenate([w1, w2[:M, :], wq[:M, :]], axis=1).T.astype(bf16)
    bf1 = jnp.concatenate([b1, b2, bq], axis=1).T.astype(f32)        # (3M+2, 1)

    # Fused same-LHS weights for hs1: [W2[M:] | Wq[M:2M]]     -> (2M+2, M)
    wf2 = jnp.concatenate([w2[M:, :], wq[M:2 * M, :]], axis=1).T.astype(bf16)

    wqc = wq[2 * M:, :].T.astype(bf16)                    # (2, 2M)
    return (w0k, b0k, wf1, bf1, wf2, wqc)


def _estimate_tile_vmem(bt, S, M):
    """Rough per-tile VMEM bytes: double-buffered streamed blocks + live activations."""
    io = 2 * bt * S * 4 + 2 * 2 * bt * 4
    acts = bt * (M + (3 * M + 2) + (2 * M + 2) + 2 * M) * 6   # f32 + bf16 copies
    return io + acts


def _pick_batch_tile(B, b_tile, S, M):
    """Large tiles amortize ~0.35us/grid-step overhead; >=2 blocks engage both v7x TCs;
    multiples of 128 keep the (bt,S)/(2,bt) BlockSpecs aligned; a VMEM guard keeps the
    footprint well under the 32 MiB scoped default (v7x physical VMEM is only 64 MiB)."""
    if B <= 128:
        return B                                 # single block == full array, no constraint
    half = -(-B // 2)                            # aim for at least 2 blocks (v7x megacore)
    bt = -(-half // 128) * 128                   # round up to a multiple of 128
    bt = min(b_tile, bt)
    budget = 24 * 1024 * 1024
    while bt > 128 and _estimate_tile_vmem(bt, S, M) > budget:
        bt -= 128
    return bt


def critic_adv_twin_forward(state, params, b_tile=1024):
    """CriticAdvTwin.forward(state) -> (q1, q2), each of shape (B, 1).

    b_tile: sweep 512-2048 per generation; 1024 is a good default everywhere.
    """
    B, S = state.shape
    kparams = prepare_kernel_params(params)
    M = kparams[0].shape[0]

    bt = _pick_batch_tile(B, b_tile, S, M)
    n_blocks = pl.cdiv(B, bt)
    B_pad = n_blocks * bt
    if B_pad != B:
        state = jnp.pad(state, ((0, B_pad - B), (0, 0)))

    in_specs = [pl.BlockSpec((bt, S), lambda i: (i, 0))]          # streamed batch tile
    # Weights/biases: full arrays with a constant index map -> VMEM-resident across steps.
    # (pipeline_mode=pl.Buffered(1) would shave the redundant second buffer; left at the
    #  default since the extra buffer is only a few KiB here.)
    in_specs += [pl.BlockSpec(p.shape, lambda i: (0, 0)) for p in kparams]
    out_specs = pl.BlockSpec((2, bt), lambda i: (0, i))           # lane-dense (2, bt) tile

    flops = 2 * B_pad * (S * M + M * (3 * M + 2) + M * (2 * M + 2) + 2 * M * 2)
    bytes_accessed = (B_pad * S * state.dtype.itemsize + B_pad * 2 * 4
                      + sum(int(p.size) * p.dtype.itemsize for p in kparams))
    cost = pl.CostEstimate(flops=int(flops), transcendentals=0,
                           bytes_accessed=int(bytes_accessed))

    q_t = pl.pallas_call(
        critic_twin_kernel,
        grid=(n_blocks,),
        out_shape=jax.ShapeDtypeStruct((2, B_pad), jnp.float32),
        in_specs=in_specs,
        out_specs=out_specs,
        compiler_params=pltpu.CompilerParams(
            dimension_semantics=("parallel",)),    # shard batch tiles across TCs (v7x)
        cost_estimate=cost,
    )(state, *kparams)

    q1 = q_t[0, :B][:, None]
    q2 = q_t[1, :B][:, None]
    return q1, q2


def init_params(key, state_dim, mid_dim):
    """Deterministic synthetic parameters (shapes match the PyTorch module).

    Weights are stored as (in_features, out_features); biases as (1, out).
    PyTorch uses orthogonal init (std=1.0 trunk, 0.1 heads) and constant bias 1e-6;
    scaled normals are used here, which does not affect the forward-pass semantics tested.
    """
    ks = jax.random.split(key, 5)

    def lin(k, fan_in, fan_out, std=1.0):
        w = std * jax.random.normal(k, (fan_in, fan_out), jnp.float32) / jnp.sqrt(fan_in)
        b = jnp.full((1, fan_out), 1e-6, jnp.float32)
        return w, b

    w0, b0 = lin(ks[0], state_dim, mid_dim)              # net[0]   Linear(S, M)
    w1, b1 = lin(ks[1], mid_dim, mid_dim)                # dense1   Linear(M, M)
    w2, b2 = lin(ks[2], 2 * mid_dim, 2 * mid_dim)        # dense2   Linear(2M, 2M)
    wq1, bq1 = lin(ks[3], 4 * mid_dim, 1, std=0.1)       # net_q1   Linear(4M, 1)
    wq2, bq2 = lin(ks[4], 4 * mid_dim, 1, std=0.1)       # net_q2   Linear(4M, 1)
    return (w0, b0, w1, b1, w2, b2, wq1, bq1, wq2, bq2)


def reference_forward(state, params):
    """Pure-JAX reference (full weights + explicit concats) mirroring the kernel's
    bf16-operand / f32-accumulate numerics."""
    w0, b0, w1, b1, w2, b2, wq1, bq1, wq2, bq2 = params
    bf16, f32 = jnp.bfloat16, jnp.float32

    def mm(x, w):
        return jnp.dot(x.astype(bf16), w.astype(bf16), preferred_element_type=f32)

    h1 = jnp.maximum(mm(state, w0) + b0, 0.0)
    t1 = mm(h1, w1) + b1
    hs1 = jnp.clip(t1 + 3.0, 0.0, 6.0) / 6.0 * t1
    x2 = jnp.concatenate([h1, hs1], axis=1)
    t2 = mm(x2, w2) + b2
    hs2 = jnp.clip(t2 + 3.0, 0.0, 6.0) / 6.0 * t2
    x3 = jnp.concatenate([x2, hs2], axis=1)
    q1 = mm(x3, wq1) + bq1
    q2 = mm(x3, wq2) + bq2
    return q1, q2


if __name__ == "__main__":
    state_dim, mid_dim = 12, 32
    key = jax.random.PRNGKey(0)
    k_s, k_p, k_s2 = jax.random.split(key, 3)
    params = init_params(k_p, state_dim, mid_dim)

    # Small primary test (single-block path), matching the module's expected usage.
    batch = 2
    state = jax.random.normal(k_s, (batch, state_dim), jnp.float32)
    q1, q2 = critic_adv_twin_forward(state, params)
    (q1, q2) = jax.block_until_ready((q1, q2))
    r1, r2 = reference_forward(state, params)
    assert q1.shape == (batch, 1) and q2.shape == (batch, 1)
    assert jnp.allclose(q1, r1, atol=2e-3, rtol=2e-3), (q1, r1)
    assert jnp.allclose(q2, r2, atol=2e-3, rtol=2e-3), (q2, r2)

    # Secondary smoke test exercising the tiled multi-block (2 TC) + padded-batch path.
    batch2 = 384
    state2 = jax.random.normal(k_s2, (batch2, state_dim), jnp.float32)
    p1, p2 = critic_adv_twin_forward(state2, params)
    (p1, p2) = jax.block_until_ready((p1, p2))
    s1, s2 = reference_forward(state2, params)
    assert p1.shape == (batch2, 1) and p2.shape == (batch2, 1)
    assert jnp.allclose(p1, s1, atol=2e-3, rtol=2e-3)
    assert jnp.allclose(p2, s2, atol=2e-3, rtol=2e-3)

    print("KERNEL_OK")
</pallas_src>

<mosaic_0001>
module attributes {stable_mosaic.version = 11 : i64} {
  func.func @critic_twin_kernel(%arg0: i32, %arg1: memref<2x12xf32, #tpu.memory_space<vmem>>, %arg2: memref<32x12xbf16, #tpu.memory_space<vmem>>, %arg3: memref<32x1xf32, #tpu.memory_space<vmem>>, %arg4: memref<98x32xbf16, #tpu.memory_space<vmem>>, %arg5: memref<98x1xf32, #tpu.memory_space<vmem>>, %arg6: memref<66x32xbf16, #tpu.memory_space<vmem>>, %arg7: memref<2x64xbf16, #tpu.memory_space<vmem>>, %arg8: memref<2x2xf32, #tpu.memory_space<vmem>>) attributes {dimension_semantics = [#tpu.dimension_semantics<parallel>], iteration_bounds = array<i64: 1>, scalar_prefetch = 0 : i64, scratch_operands = 0 : i64, tpu.core_type = #tpu.core_type<tc>, window_params = [{transform_indices = @transform_0, window_bounds = array<i64: 2, 12>}, {pipeline_mode = #tpu.pipeline_mode<synchronous>, transform_indices = @transform_1, window_bounds = array<i64: 32, 12>}, {pipeline_mode = #tpu.pipeline_mode<synchronous>, transform_indices = @transform_2, window_bounds = array<i64: 32, 1>}, {pipeline_mode = #tpu.pipeline_mode<synchronous>, transform_indices = @transform_3, window_bounds = array<i64: 98, 32>}, {pipeline_mode = #tpu.pipeline_mode<synchronous>, transform_indices = @transform_4, window_bounds = array<i64: 98, 1>}, {pipeline_mode = #tpu.pipeline_mode<synchronous>, transform_indices = @transform_5, window_bounds = array<i64: 66, 32>}, {pipeline_mode = #tpu.pipeline_mode<synchronous>, transform_indices = @transform_6, window_bounds = array<i64: 2, 64>}, {transform_indices = @transform_7, window_bounds = array<i64: 2, 2>}]} {
    %c0 = arith.constant 0 : index
    %c0_0 = arith.constant 0 : index
    %0 = vector.load %arg1[%c0, %c0_0] : memref<2x12xf32, #tpu.memory_space<vmem>>, vector<2x12xf32>
    %1 = arith.truncf %0 : vector<2x12xf32> to vector<2x12xbf16>
    %c0_1 = arith.constant 0 : index
    %c0_2 = arith.constant 0 : index
    %2 = vector.load %arg2[%c0_1, %c0_2] : memref<32x12xbf16, #tpu.memory_space<vmem>>, vector<32x12xbf16>
    %cst = arith.constant dense<0.000000e+00> : vector<32x2xf32>
    %3 = tpu.matmul %2, %1, %cst {dimension_numbers = #tpu.dot_dimension_numbers<[1], [1], [0], [0], [0, 0, 1, 0], [], []>} : vector<32x12xbf16>, vector<2x12xbf16>, vector<32x2xf32> -> vector<32x2xf32>
    %c0_3 = arith.constant 0 : index
    %c0_4 = arith.constant 0 : index
    %4 = vector.load %arg3[%c0_3, %c0_4] : memref<32x1xf32, #tpu.memory_space<vmem>>, vector<32x1xf32>
    %5 = vector.broadcast %4 : vector<32x1xf32> to vector<32x2xf32>
    %6 = arith.addf %3, %5 : vector<32x2xf32>
    %cst_5 = arith.constant 0.000000e+00 : f32
    %7 = vector.broadcast %cst_5 : f32 to vector<32x2xf32>
    %8 = arith.maximumf %6, %7 : vector<32x2xf32>
    %9 = arith.truncf %8 : vector<32x2xf32> to vector<32x2xbf16>
    %c0_6 = arith.constant 0 : index
    %c0_7 = arith.constant 0 : index
    %10 = vector.load %arg4[%c0_6, %c0_7] : memref<98x32xbf16, #tpu.memory_space<vmem>>, vector<98x32xbf16>
    %cst_8 = arith.constant dense<0.000000e+00> : vector<98x2xf32>
    %11 = tpu.matmul %10, %9, %cst_8 {dimension_numbers = #tpu.dot_dimension_numbers<[1], [0], [0], [1], [0, 0, 1, 1], [], []>} : vector<98x32xbf16>, vector<32x2xbf16>, vector<98x2xf32> -> vector<98x2xf32>
    %c0_9 = arith.constant 0 : index
    %c0_10 = arith.constant 0 : index
    %12 = vector.load %arg5[%c0_9, %c0_10] : memref<98x1xf32, #tpu.memory_space<vmem>>, vector<98x1xf32>
    %13 = vector.broadcast %12 : vector<98x1xf32> to vector<98x2xf32>
    %14 = arith.addf %11, %13 : vector<98x2xf32>
    %15 = vector.extract_strided_slice %14 {offsets = [0, 0], sizes = [32, 2], strides = [1, 1]} : vector<98x2xf32> to vector<32x2xf32>
    %16 = vector.extract_strided_slice %14 {offsets = [32, 0], sizes = [64, 2], strides = [1, 1]} : vector<98x2xf32> to vector<64x2xf32>
    %17 = vector.extract_strided_slice %14 {offsets = [96, 0], sizes = [2, 2], strides = [1, 1]} : vector<98x2xf32> to vector<2x2xf32>
    %cst_11 = arith.constant 3.000000e+00 : f32
    %18 = vector.broadcast %cst_11 : f32 to vector<32x2xf32>
    %19 = arith.addf %15, %18 : vector<32x2xf32>
    %cst_12 = arith.constant 0.000000e+00 : f32
    %cst_13 = arith.constant 6.000000e+00 : f32
    %20 = vector.broadcast %cst_12 : f32 to vector<32x2xf32>
    %21 = arith.maximumf %20, %19 : vector<32x2xf32>
    %22 = vector.broadcast %cst_13 : f32 to vector<32x2xf32>
    %23 = arith.minimumf %22, %21 : vector<32x2xf32>
    %cst_14 = arith.constant 0.166666672 : f32
    %24 = vector.broadcast %cst_14 : f32 to vector<32x2xf32>
    %25 = arith.mulf %23, %24 : vector<32x2xf32>
    %26 = arith.mulf %25, %15 : vector<32x2xf32>
    %27 = arith.truncf %26 : vector<32x2xf32> to vector<32x2xbf16>
    %c0_15 = arith.constant 0 : index
    %c0_16 = arith.constant 0 : index
    %28 = vector.load %arg6[%c0_15, %c0_16] : memref<66x32xbf16, #tpu.memory_space<vmem>>, vector<66x32xbf16>
    %cst_17 = arith.constant dense<0.000000e+00> : vector<66x2xf32>
    %29 = tpu.matmul %28, %27, %cst_17 {dimension_numbers = #tpu.dot_dimension_numbers<[1], [0], [0], [1], [0, 0, 1, 1], [], []>} : vector<66x32xbf16>, vector<32x2xbf16>, vector<66x2xf32> -> vector<66x2xf32>
    %30 = vector.extract_strided_slice %29 {offsets = [0, 0], sizes = [64, 2], strides = [1, 1]} : vector<66x2xf32> to vector<64x2xf32>
    %31 = arith.addf %16, %30 : vector<64x2xf32>
    %32 = vector.extract_strided_slice %29 {offsets = [64, 0], sizes = [2, 2], strides = [1, 1]} : vector<66x2xf32> to vector<2x2xf32>
    %33 = arith.addf %17, %32 : vector<2x2xf32>
    %cst_18 = arith.constant 3.000000e+00 : f32
    %34 = vector.broadcast %cst_18 : f32 to vector<64x2xf32>
    %35 = arith.addf %31, %34 : vector<64x2xf32>
    %cst_19 = arith.constant 0.000000e+00 : f32
    %cst_20 = arith.constant 6.000000e+00 : f32
    %36 = vector.broadcast %cst_19 : f32 to vector<64x2xf32>
    %37 = arith.maximumf %36, %35 : vector<64x2xf32>
    %38 = vector.broadcast %cst_20 : f32 to vector<64x2xf32>
    %39 = arith.minimumf %38, %37 : vector<64x2xf32>
    %cst_21 = arith.constant 0.166666672 : f32
    %40 = vector.broadcast %cst_21 : f32 to vector<64x2xf32>
    %41 = arith.mulf %39, %40 : vector<64x2xf32>
    %42 = arith.mulf %41, %31 : vector<64x2xf32>
    %43 = arith.truncf %42 : vector<64x2xf32> to vector<64x2xbf16>
    %c0_22 = arith.constant 0 : index
    %c0_23 = arith.constant 0 : index
    %44 = vector.load %arg7[%c0_22, %c0_23] : memref<2x64xbf16, #tpu.memory_space<vmem>>, vector<2x64xbf16>
    %cst_24 = arith.constant dense<0.000000e+00> : vector<2x2xf32>
    %45 = tpu.matmul %44, %43, %cst_24 {dimension_numbers = #tpu.dot_dimension_numbers<[1], [0], [0], [1], [0, 0, 1, 1], [], []>} : vector<2x64xbf16>, vector<64x2xbf16>, vector<2x2xf32> -> vector<2x2xf32>
    %46 = arith.addf %33, %45 : vector<2x2xf32>
    %c0_25 = arith.constant 0 : index
    %c0_26 = arith.constant 0 : index
    %47 = vector.load %arg8[%c0_25, %c0_26] : memref<2x2xf32, #tpu.memory_space<vmem>>, vector<2x2xf32>
    tpu.vector_store %arg8[%c0_25, %c0_26], %46 {strides = array<i32>} : memref<2x2xf32, #tpu.memory_space<vmem>>, vector<2x2xf32>,
    return
  }
  func.func @transform_0(%arg0: i32) -> (i32, i32) {
    %c0_i32 = arith.constant 0 : i32
    %c0_i32_0 = arith.constant 0 : i32
    return %arg0, %c0_i32 : i32, i32
  }
  func.func @transform_1(%arg0: i32) -> (i32, i32) {
    %c0_i32 = arith.constant 0 : i32
    %c0_i32_0 = arith.constant 0 : i32
    %c0_i32_1 = arith.constant 0 : i32
    return %c0_i32, %c0_i32_0 : i32, i32
  }
  func.func @transform_2(%arg0: i32) -> (i32, i32) {
    %c0_i32 = arith.constant 0 : i32
    %c0_i32_0 = arith.constant 0 : i32
    %c0_i32_1 = arith.constant 0 : i32
    return %c0_i32, %c0_i32_0 : i32, i32
  }
  func.func @transform_3(%arg0: i32) -> (i32, i32) {
    %c0_i32 = arith.constant 0 : i32
    %c0_i32_0 = arith.constant 0 : i32
    %c0_i32_1 = arith.constant 0 : i32
    return %c0_i32, %c0_i32_0 : i32, i32
  }
  func.func @transform_4(%arg0: i32) -> (i32, i32) {
    %c0_i32 = arith.constant 0 : i32
    %c0_i32_0 = arith.constant 0 : i32
    %c0_i32_1 = arith.constant 0 : i32
    return %c0_i32, %c0_i32_0 : i32, i32
  }
  func.func @transform_5(%arg0: i32) -> (i32, i32) {
    %c0_i32 = arith.constant 0 : i32
    %c0_i32_0 = arith.constant 0 : i32
    %c0_i32_1 = arith.constant 0 : i32
    return %c0_i32, %c0_i32_0 : i32, i32
  }
  func.func @transform_6(%arg0: i32) -> (i32, i32) {
    %c0_i32 = arith.constant 0 : i32
    %c0_i32_0 = arith.constant 0 : i32
    %c0_i32_1 = arith.constant 0 : i32
    return %c0_i32, %c0_i32_0 : i32, i32
  }
  func.func @transform_7(%arg0: i32) -> (i32, i32) {
    %c0_i32 = arith.constant 0 : i32
    %c0_i32_0 = arith.constant 0 : i32
    return %c0_i32, %arg0 : i32, i32
  }
}

</mosaic_0001>

<llo_original>
// kernel: tpu_custom_call.1
$region0: #{tpu_custom_call.1}
  #allocation0 [shape = 'u32[]', space=smem, size = 0x4, offset = 0x4, fixed_abs, tag = 'smem constant byte address 0x4 - core index']
  #allocation1 [shape = 'u32[144,128]{1,0:T(1,128)}', space=vmem, size = 0x12000, scoped, tag = 'internal scratch']
  %s0 = inlined_call_operand.vmem [shape: f32[2,12], index: 0, kind: input, shape index: {}]
  %s1 = inlined_call_operand.vmem [shape: bf16[32,12], index: 1, kind: input, shape index: {}]
  %s2 = inlined_call_operand.vmem [shape: f32[32,1], index: 2, kind: input, shape index: {}]
  %s3 = inlined_call_operand.vmem [shape: bf16[98,32], index: 3, kind: input, shape index: {}]
  %s4 = inlined_call_operand.vmem [shape: f32[98,1], index: 4, kind: input, shape index: {}]
  %s5 = inlined_call_operand.vmem [shape: bf16[66,32], index: 5, kind: input, shape index: {}]
  %s6 = inlined_call_operand.vmem [shape: bf16[2,64], index: 6, kind: input, shape index: {}]
  %s7 = inlined_call_operand.hbm [shape: f32[2,2], index: 7, kind: output, shape index: {}]
  %s8 = sld [smem:[#allocation0]]
  $region38: #{tpu_custom_call.1} parent=0
    _
  %s10 = ssub.s32 1, %s8
  %s11 = scalar_select 0, %s10, %s8
  $region1: #{tpu_custom_call.1} parent=0
    #allocation2 [shape = 'u8[1024]{0}', space=vmem, size = 0x400, scoped, tag = 'output window, operand 0, single buffered']
    #allocation3 [shape = 's32[1]{0}', space=sflag, size = 0x4, scoped, tag = 'scoped memory for tpu_custom_call.1']
    %12 = vsyncpa [#allocation3], 0
    // Predicated region
    $region2: #{tpu_custom_call.1} parent=1 // pred_check
      _
    $region3: #{tpu_custom_call.1} parent=1 // pred_check_branch
      %14 = sbr.rel (0) target = $region5
    $region4: #{tpu_custom_call.1} parent=1 // pred_region
      _
    $region5: #{tpu_custom_call.1} parent=1 // pred_fallthru
      _
    // Predicated region
    $region6: #{tpu_custom_call.1} parent=1 // pred_check
      _
    $region7: #{tpu_custom_call.1} parent=1 // pred_check_branch
      %16 = sbr.rel (0) target = $region9
    $region8: #{tpu_custom_call.1} parent=1 // pred_region
      _
    $region9: #{tpu_custom_call.1} parent=1 // pred_fallthru
      _
    // Predicated region
    $region10: #{tpu_custom_call.1} parent=1 // pred_check
      _
    $region11: #{tpu_custom_call.1} parent=1 // pred_check_branch
      %18 = sbr.rel (0) target = $region13
    $region12: #{tpu_custom_call.1} parent=1 // pred_region
      _
    $region13: #{tpu_custom_call.1} parent=1 // pred_fallthru
      _
    // Predicated region
    $region14: #{tpu_custom_call.1} parent=1 // pred_check
      _
    $region15: #{tpu_custom_call.1} parent=1 // pred_check_branch
      %20 = sbr.rel (0) target = $region17
    $region16: #{tpu_custom_call.1} parent=1 // pred_region
      _
    $region17: #{tpu_custom_call.1} parent=1 // pred_fallthru
      _
    // Predicated region
    $region18: #{tpu_custom_call.1} parent=1 // pred_check
      _
    $region19: #{tpu_custom_call.1} parent=1 // pred_check_branch
      %22 = sbr.rel (0) target = $region21
    $region20: #{tpu_custom_call.1} parent=1 // pred_region
      _
    $region21: #{tpu_custom_call.1} parent=1 // pred_fallthru
      _
    // Predicated region
    $region22: #{tpu_custom_call.1} parent=1 // pred_check
      _
    $region23: #{tpu_custom_call.1} parent=1 // pred_check_branch
      %24 = sbr.rel (0) target = $region25
    $region24: #{tpu_custom_call.1} parent=1 // pred_region
      _
    $region25: #{tpu_custom_call.1} parent=1 // pred_fallthru
      _
    // Predicated region
    $region26: #{tpu_custom_call.1} parent=1 // pred_check
      _
    $region27: #{tpu_custom_call.1} parent=1 // pred_check_branch
      %26 = sbr.rel (0) target = $region29
    $region28: #{tpu_custom_call.1} parent=1 // pred_region
      _
    $region29: #{tpu_custom_call.1} parent=1 // pred_fallthru
      _
    %v28 = vld [vmem:[%s0] sm:$0x3]
    %v29 = vpack.c.bf16 %v28, %v28
    %v30 = vld [vmem:[%s1] sm:$0xf]
    %v31 = vld [vmem:[%s1 + $0x4] sm:$0xf]
    %v32 = vld [vmem:[%s1 + $0x8] sm:$0xf]
    %v33 = vld [vmem:[%s1 + $0xc] sm:$0xf]
    %v34 = vld [vmem:[%s2] sm:$0xff]
    %v35 = vld [vmem:[%s2 + $0x8] sm:$0xff]
    %v36 = vld [vmem:[%s2 + $0x10] sm:$0xff]
    %v37 = vld [vmem:[%s2 + $0x18] sm:$0xff]
    %39 = vset.pattern.permute.xlu0 0
    %40 = vperm.xlu0 %39, %v34
    %v41 = vpop.permute.xlu0 %40
    %44 = vset.pattern.permute.xlu0 0
    %45 = vperm.xlu0 %44, %v35
    %v46 = vpop.permute.xlu0 %45
    %49 = vset.pattern.permute.xlu0 0
    %50 = vperm.xlu0 %49, %v36
    %v51 = vpop.permute.xlu0 %50
    %54 = vset.pattern.permute.xlu0 0
    %55 = vperm.xlu0 %54, %v37
    %v56 = vpop.permute.xlu0 %55
    %v62 = vunpack.c.l.b16 %v30
    %v63 = vunpack.c.l.b16 %v31
    %v64 = vunpack.c.l.b16 %v32
    %v65 = vunpack.c.l.b16 %v33
    %v66 = vpack.c.b16 %v63, %v62
    %v67 = vpack.c.b16 %v65, %v64
    %vm68 = vcmask 97280
    %v70 = vsel %vm68, %v66, 0
    %v73 = vsel %vm68, %v67, 0
    %v76 = vsel %vm68, %v29, 0
    %78 = vmatprep.subr.bf16.mxu0 0
    %79 = vmatpush1.bf16.xpose.msra.mxu0 %v76
    %80 = vmatprep.subr.bf16.mxu0 0
    %81 = vmatpush1.bf16.xpose.msra.mxu0 0
    %82 = vmatprep.subr.bf16.mxu0 0
    %83 = vmatpush1.bf16.xpose.msra.mxu0 0
    %84 = vmatprep.subr.bf16.mxu0 0
    %85 = vmatpush1.bf16.xpose.msra.mxu0 0
    %86 = vmatprep.subr.bf16.mxu0 0
    %87 = vmatpush1.bf16.xpose.msra.mxu0 0
    %88 = vmatprep.subr.bf16.mxu0 0
    %89 = vmatpush1.bf16.xpose.msra.mxu0 0
    %90 = vmatprep.subr.bf16.mxu0 0
    %91 = vmatpush1.bf16.xpose.msra.mxu0 0
    %92 = vmatprep.subr.bf16.mxu0 0
    %93 = vmatpush1.bf16.xpose.msra.mxu0 0
    %94 = vmatprep.subr.bf16.mxu0 0
    %95 = vmatpush1.bf16.xpose.msra.mxu0 0
    %96 = vmatprep.subr.bf16.mxu0 0
    %97 = vmatpush1.bf16.xpose.msra.mxu0 0
    %98 = vmatprep.subr.bf16.mxu0 0
    %99 = vmatpush1.bf16.xpose.msra.mxu0 0
    %100 = vmatprep.subr.bf16.mxu0 0
    %101 = vmatpush1.bf16.xpose.msra.mxu0 0
    %102 = vmatprep.subr.bf16.mxu0 0
    %103 = vmatpush1.bf16.xpose.msra.mxu0 0
    %104 = vmatprep.subr.bf16.mxu0 0
    %105 = vmatpush1.bf16.xpose.msra.mxu0 0
    %106 = vmatprep.subr.bf16.mxu0 0
    %107 = vmatpush1.bf16.xpose.msra.mxu0 0
    %108 = vmatprep.subr.bf16.mxu0 0
    %109 = vmatpush1.bf16.xpose.msra.mxu0 0
    %110 = vmatprep.mubr.bf16.mxu0 0
    %111 = vmatmul.mubr.bf16.gmra.mrb[0].mxu0 %v70
    %v112 = vpop.f32.mrb[0].mxu0
    %v113 = vadd.f32 %v41, %v112
    %v114 = vpop.f32.mrb[0].mxu0
    %v115 = vpop.f32.mrb[0].mxu0
    %v116 = vadd.f32 %v46, %v115
    %v117 = vpop.f32.mrb[0].mxu0
    %118 = vmatprep.mubr.bf16.mxu0 0
    %119 = vmatmul.mubr.bf16.gmra.mrb[0].mxu0 %v73
    %v120 = vpop.f32.mrb[0].mxu0
    %v121 = vadd.f32 %v51, %v120
    %v122 = vpop.f32.mrb[0].mxu0
    %v123 = vpop.f32.mrb[0].mxu0
    %v124 = vadd.f32 %v56, %v123
    %v125 = vpop.f32.mrb[0].mxu0
    %126 = vdwg.mxu0
    %v127 = vmax.f32 %v113, 0.0
    %v128 = vmax.f32 %v116, 0.0
    %v129 = vmax.f32 %v121, 0.0
    %v130 = vmax.f32 %v124, 0.0
    %v131 = vpack.c.bf16 %v128, %v127
    %v132 = vpack.c.bf16 %v130, %v129
    %v133 = vld [vmem:[%s3] sm:$0xf]
    %v134 = vld [vmem:[%s3 + $0x4] sm:$0xf]
    %v135 = vld [vmem:[%s3 + $0x8] sm:$0xf]
    %v136 = vld [vmem:[%s3 + $0xc] sm:$0xf]
    %v137 = vld [vmem:[%s3 + $0x10] sm:$0xf]
    %v138 = vld [vmem:[%s3 + $0x14] sm:$0xf]
    %v139 = vld [vmem:[%s3 + $0x18] sm:$0xf]
    %v140 = vld [vmem:[%s3 + $0x1c] sm:$0xf]
    %v141 = vld [vmem:[%s3 + $0x20] sm:$0xf]
    %v142 = vld [vmem:[%s3 + $0x24] sm:$0xf]
    %v143 = vld [vmem:[%s3 + $0x28] sm:$0xf]
    %v144 = vld [vmem:[%s3 + $0x2c] sm:$0xf]
    %v145 = vld [vmem:[%s3 + $0x30] sm:$0x1]
    %v146 = vld [vmem:[%s4] sm:$0xff]
    %v147 = vld [vmem:[%s4 + $0x8] sm:$0xff]
    %v148 = vld [vmem:[%s4 + $0x10] sm:$0xff]
    %v149 = vld [vmem:[%s4 + $0x18] sm:$0xff]
    %v150 = vld [vmem:[%s4 + $0x20] sm:$0xff]
    %v151 = vld [vmem:[%s4 + $0x28] sm:$0xff]
    %v152 = vld [vmem:[%s4 + $0x30] sm:$0xff]
    %v153 = vld [vmem:[%s4 + $0x38] sm:$0xff]
    %v154 = vld [vmem:[%s4 + $0x40] sm:$0xff]
    %v155 = vld [vmem:[%s4 + $0x48] sm:$0xff]
    %v156 = vld [vmem:[%s4 + $0x50] sm:$0xff]
    %v157 = vld [vmem:[%s4 + $0x58] sm:$0xff]
    %v158 = vld [vmem:[%s4 + $0x60] sm:$0x3]
    %160 = vset.pattern.permute.xlu0 0
    %161 = vperm.xlu0 %160, %v146
    %v162 = vpop.permute.xlu0 %161
    %165 = vset.pattern.permute.xlu0 0
    %166 = vperm.xlu0 %165, %v147
    %v167 = vpop.permute.xlu0 %166
    %170 = vset.pattern.permute.xlu0 0
    %171 = vperm.xlu0 %170, %v148
    %v172 = vpop.permute.xlu0 %171
    %175 = vset.pattern.permute.xlu0 0
    %176 = vperm.xlu0 %175, %v149
    %v177 = vpop.permute.xlu0 %176
    %180 = vset.pattern.permute.xlu0 0
    %181 = vperm.xlu0 %180, %v150
    %v182 = vpop.permute.xlu0 %181
    %185 = vset.pattern.permute.xlu0 0
    %186 = vperm.xlu0 %185, %v151
    %v187 = vpop.permute.xlu0 %186
    %190 = vset.pattern.permute.xlu0 0
    %191 = vperm.xlu0 %190, %v152
    %v192 = vpop.permute.xlu0 %191
    %195 = vset.pattern.permute.xlu0 0
    %196 = vperm.xlu0 %195, %v153
    %v197 = vpop.permute.xlu0 %196
    %200 = vset.pattern.permute.xlu0 0
    %201 = vperm.xlu0 %200, %v154
    %v202 = vpop.permute.xlu0 %201
    %205 = vset.pattern.permute.xlu0 0
    %206 = vperm.xlu0 %205, %v155
    %v207 = vpop.permute.xlu0 %206
    %210 = vset.pattern.permute.xlu0 0
    %211 = vperm.xlu0 %210, %v156
    %v212 = vpop.permute.xlu0 %211
    %215 = vset.pattern.permute.xlu0 0
    %216 = vperm.xlu0 %215, %v157
    %v217 = vpop.permute.xlu0 %216
    %220 = vset.pattern.permute.xlu0 0
    %221 = vperm.xlu0 %220, %v158
    %v222 = vpop.permute.xlu0 %221
    %v237 = vunpack.c.l.b16 %v133
    %v238 = vunpack.c.l.b16 %v134
    %v239 = vunpack.c.l.b16 %v135
    %v240 = vunpack.c.l.b16 %v136
    %v241 = vunpack.c.l.b16 %v137
    %v242 = vunpack.c.l.b16 %v138
    %v243 = vunpack.c.l.b16 %v139
    %v244 = vunpack.c.l.b16 %v140
    %v245 = vunpack.c.l.b16 %v141
    %v246 = vunpack.c.l.b16 %v142
    %v247 = vunpack.c.l.b16 %v143
    %v248 = vunpack.c.l.b16 %v144
    %v249 = vunpack.c.l.b16 %v145
    %v250 = vpack.c.b16 %v238, %v237
    %v251 = vpack.c.b16 %v240, %v239
    %v252 = vpack.c.b16 %v242, %v241
    %v253 = vpack.c.b16 %v244, %v243
    %v254 = vpack.c.b16 %v246, %v245
    %v255 = vpack.c.b16 %v248, %v247
    %v256 = vpack.c.b16 %v249, %v249
    %vm257 = vcmask 261120
    %v259 = vsel %vm257, %v250, 0
    %v262 = vsel %vm257, %v251, 0
    %v265 = vsel %vm257, %v252, 0
    %v268 = vsel %vm257, %v253, 0
    %v271 = vsel %vm257, %v254, 0
    %v274 = vsel %vm257, %v255, 0
    %v277 = vsel %vm257, %v256, 0
    %279 = vmatprep.subr.bf16.mxu0 0
    %280 = vmatpush1.bf16.msra.mxu0 %v131
    %281 = vmatprep.subr.bf16.mxu0 0
    %282 = vmatpush1.bf16.msra.mxu0 %v132
    %283 = vmatprep.subr.bf16.mxu0 0
    %284 = vmatpush1.bf16.msra.mxu0 0
    %285 = vmatprep.subr.bf16.mxu0 0
    %286 = vmatpush1.bf16.msra.mxu0 0
    %287 = vmatprep.subr.bf16.mxu0 0
    %288 = vmatpush1.bf16.msra.mxu0 0
    %289 = vmatprep.subr.bf16.mxu0 0
    %290 = vmatpush1.bf16.msra.mxu0 0
    %291 = vmatprep.subr.bf16.mxu0 0
    %292 = vmatpush1.bf16.msra.mxu0 0
    %293 = vmatprep.subr.bf16.mxu0 0
    %294 = vmatpush1.bf16.msra.mxu0 0
    %295 = vmatprep.subr.bf16.mxu0 0
    %296 = vmatpush1.bf16.msra.mxu0 0
    %297 = vmatprep.subr.bf16.mxu0 0
    %298 = vmatpush1.bf16.msra.mxu0 0
    %299 = vmatprep.subr.bf16.mxu0 0
    %300 = vmatpush1.bf16.msra.mxu0 0
    %301 = vmatprep.subr.bf16.mxu0 0
    %302 = vmatpush1.bf16.msra.mxu0 0
    %303 = vmatprep.subr.bf16.mxu0 0
    %304 = vmatpush1.bf16.msra.mxu0 0
    %305 = vmatprep.subr.bf16.mxu0 0
    %306 = vmatpush1.bf16.msra.mxu0 0
    %307 = vmatprep.subr.bf16.mxu0 0
    %308 = vmatpush1.bf16.msra.mxu0 0
    %309 = vmatprep.subr.bf16.mxu0 0
    %310 = vmatpush1.bf16.msra.mxu0 0
    %311 = vmatprep.mubr.bf16.mxu0 0
    %312 = vmatmul.mubr.bf16.gmra.mrb[0].mxu0 %v259
    %v313 = vpop.f32.mrb[0].mxu0
    %v314 = vadd.f32 %v162, %v313
    %v315 = vpop.f32.mrb[0].mxu0
    %v316 = vpop.f32.mrb[0].mxu0
    %v317 = vadd.f32 %v167, %v316
    %v318 = vpop.f32.mrb[0].mxu0
    %319 = vmatprep.mubr.bf16.mxu0 0
    %320 = vmatmul.mubr.bf16.gmra.mrb[0].mxu0 %v262
    %v321 = vpop.f32.mrb[0].mxu0
    %v322 = vadd.f32 %v172, %v321
    %v323 = vpop.f32.mrb[0].mxu0
    %v324 = vpop.f32.mrb[0].mxu0
    %v325 = vadd.f32 %v177, %v324
    %v326 = vpop.f32.mrb[0].mxu0
    %327 = vmatprep.mubr.bf16.mxu0 0
    %328 = vmatmul.mubr.bf16.gmra.mrb[0].mxu0 %v265
    %v329 = vpop.f32.mrb[0].mxu0
    %v330 = vadd.f32 %v182, %v329
    %v331 = vpop.f32.mrb[0].mxu0
    %v332 = vpop.f32.mrb[0].mxu0
    %v333 = vadd.f32 %v187, %v332
    %v334 = vpop.f32.mrb[0].mxu0
    %335 = vmatprep.mubr.bf16.mxu0 0
    %336 = vmatmul.mubr.bf16.gmra.mrb[0].mxu0 %v268
    %v337 = vpop.f32.mrb[0].mxu0
    %v338 = vadd.f32 %v192, %v337
    %v339 = vpop.f32.mrb[0].mxu0
    %v340 = vpop.f32.mrb[0].mxu0
    %v341 = vadd.f32 %v197, %v340
    %v342 = vpop.f32.mrb[0].mxu0
    %343 = vmatprep.mubr.bf16.mxu0 0
    %344 = vmatmul.mubr.bf16.gmra.mrb[0].mxu0 %v271
    %v345 = vpop.f32.mrb[0].mxu0
    %v346 = vadd.f32 %v202, %v345
    %v347 = vpop.f32.mrb[0].mxu0
    %v348 = vpop.f32.mrb[0].mxu0
    %v349 = vadd.f32 %v207, %v348
    %v350 = vpop.f32.mrb[0].mxu0
    %351 = vmatprep.mubr.bf16.mxu0 0
    %352 = vmatmul.mubr.bf16.gmra.mrb[0].mxu0 %v274
    %v353 = vpop.f32.mrb[0].mxu0
    %v354 = vadd.f32 %v212, %v353
    %v355 = vpop.f32.mrb[0].mxu0
    %v356 = vpop.f32.mrb[0].mxu0
    %v357 = vadd.f32 %v217, %v356
    %v358 = vpop.f32.mrb[0].mxu0
    %359 = vmatprep.mubr.bf16.mxu0 0
    %360 = vmatmul.mubr.bf16.gmra.mrb[0].mxu0 %v277
    %v361 = vpop.f32.mrb[0].mxu0
    %v362 = vadd.f32 %v222, %v361
    %v363 = vpop.f32.mrb[0].mxu0
    %v364 = vpop.f32.mrb[0].mxu0
    %v365 = vpop.f32.mrb[0].mxu0
    %366 = vdwg.mxu0
    %v367 = vadd.f32 %v314, 3.0
    %v368 = vadd.f32 %v317, 3.0
    %v369 = vadd.f32 %v322, 3.0
    %v370 = vadd.f32 %v325, 3.0
    %v371 = vmax.f32 %v367, 0.0
    %v372 = vmax.f32 %v368, 0.0
    %v373 = vmax.f32 %v369, 0.0
    %v374 = vmax.f32 %v370, 0.0
    %v375 = vmin.f32 %v371, 6.0
    %v376 = vmin.f32 %v372, 6.0
    %v377 = vmin.f32 %v373, 6.0
    %v378 = vmin.f32 %v374, 6.0
    %v379 = vmul.f32 %v375, 0.16666667
    %v380 = vmul.f32 %v376, 0.16666667
    %v381 = vmul.f32 %v377, 0.16666667
    %v382 = vmul.f32 %v378, 0.16666667
    %v383 = vmul.f32 %v379, %v314
    %v384 = vmul.f32 %v380, %v317
    %v385 = vmul.f32 %v381, %v322
    %v386 = vmul.f32 %v382, %v325
    %v387 = vpack.c.bf16 %v384, %v383
    %v388 = vpack.c.bf16 %v386, %v385
    %v389 = vld [vmem:[%s5] sm:$0xf]
    %v390 = vld [vmem:[%s5 + $0x4] sm:$0xf]
    %v391 = vld [vmem:[%s5 + $0x8] sm:$0xf]
    %v392 = vld [vmem:[%s5 + $0xc] sm:$0xf]
    %v393 = vld [vmem:[%s5 + $0x10] sm:$0xf]
    %v394 = vld [vmem:[%s5 + $0x14] sm:$0xf]
    %v395 = vld [vmem:[%s5 + $0x18] sm:$0xf]
    %v396 = vld [vmem:[%s5 + $0x1c] sm:$0xf]
    %v397 = vld [vmem:[%s5 + $0x20] sm:$0x1]
    %v407 = vunpack.c.l.b16 %v389
    %v408 = vunpack.c.l.b16 %v390
    %v409 = vunpack.c.l.b16 %v391
    %v410 = vunpack.c.l.b16 %v392
    %v411 = vunpack.c.l.b16 %v393
    %v412 = vunpack.c.l.b16 %v394
    %v413 = vunpack.c.l.b16 %v395
    %v414 = vunpack.c.l.b16 %v396
    %v415 = vunpack.c.l.b16 %v397
    %v416 = vpack.c.b16 %v408, %v407
    %v417 = vpack.c.b16 %v410, %v409
    %v418 = vpack.c.b16 %v412, %v411
    %v419 = vpack.c.b16 %v414, %v413
    %v420 = vpack.c.b16 %v415, %v415
    %v422 = vsel %vm257, %v416, 0
    %v425 = vsel %vm257, %v417, 0
    %v428 = vsel %vm257, %v418, 0
    %v431 = vsel %vm257, %v419, 0
    %v434 = vsel %vm257, %v420, 0
    %436 = vmatprep.subr.bf16.mxu0 0
    %437 = vmatpush1.bf16.msra.mxu0 %v387
    %438 = vmatprep.subr.bf16.mxu0 0
    %439 = vmatpush1.bf16.msra.mxu0 %v388
    %440 = vmatprep.subr.bf16.mxu0 0
    %441 = vmatpush1.bf16.msra.mxu0 0
    %442 = vmatprep.subr.bf16.mxu0 0
    %443 = vmatpush1.bf16.msra.mxu0 0
    %444 = vmatprep.subr.bf16.mxu0 0
    %445 = vmatpush1.bf16.msra.mxu0 0
    %446 = vmatprep.subr.bf16.mxu0 0
    %447 = vmatpush1.bf16.msra.mxu0 0
    %448 = vmatprep.subr.bf16.mxu0 0
    %449 = vmatpush1.bf16.msra.mxu0 0
    %450 = vmatprep.subr.bf16.mxu0 0
    %451 = vmatpush1.bf16.msra.mxu0 0
    %452 = vmatprep.subr.bf16.mxu0 0
    %453 = vmatpush1.bf16.msra.mxu0 0
    %454 = vmatprep.subr.bf16.mxu0 0
    %455 = vmatpush1.bf16.msra.mxu0 0
    %456 = vmatprep.subr.bf16.mxu0 0
    %457 = vmatpush1.bf16.msra.mxu0 0
    %458 = vmatprep.subr.bf16.mxu0 0
    %459 = vmatpush1.bf16.msra.mxu0 0
    %460 = vmatprep.subr.bf16.mxu0 0
    %461 = vmatpush1.bf16.msra.mxu0 0
    %462 = vmatprep.subr.bf16.mxu0 0
    %463 = vmatpush1.bf16.msra.mxu0 0
    %464 = vmatprep.subr.bf16.mxu0 0
    %465 = vmatpush1.bf16.msra.mxu0 0
    %466 = vmatprep.subr.bf16.mxu0 0
    %467 = vmatpush1.bf16.msra.mxu0 0
    %468 = vmatprep.mubr.bf16.mxu0 0
    %469 = vmatmul.mubr.bf16.gmra.mrb[0].mxu0 %v422
    %v470 = vpop.f32.mrb[0].mxu0
    %v471 = vadd.f32 0.0, %v470
    %v472 = vpop.f32.mrb[0].mxu0
    %v473 = vpop.f32.mrb[0].mxu0
    %v474 = vadd.f32 0.0, %v473
    %v475 = vpop.f32.mrb[0].mxu0
    %476 = vmatprep.mubr.bf16.mxu0 0
    %477 = vmatmul.mubr.bf16.gmra.mrb[0].mxu0 %v425
    %v478 = vpop.f32.mrb[0].mxu0
    %v479 = vadd.f32 0.0, %v478
    %v480 = vpop.f32.mrb[0].mxu0
    %v481 = vpop.f32.mrb[0].mxu0
    %v482 = vadd.f32 0.0, %v481
    %v483 = vpop.f32.mrb[0].mxu0
    %484 = vmatprep.mubr.bf16.mxu0 0
    %485 = vmatmul.mubr.bf16.gmra.mrb[0].mxu0 %v428
    %v486 = vpop.f32.mrb[0].mxu0
    %v487 = vadd.f32 0.0, %v486
    %v488 = vpop.f32.mrb[0].mxu0
    %v489 = vpop.f32.mrb[0].mxu0
    %v490 = vadd.f32 0.0, %v489
    %v491 = vpop.f32.mrb[0].mxu0
    %492 = vmatprep.mubr.bf16.mxu0 0
    %493 = vmatmul.mubr.bf16.gmra.mrb[0].mxu0 %v431
    %v494 = vpop.f32.mrb[0].mxu0
    %v495 = vadd.f32 0.0, %v494
    %v496 = vpop.f32.mrb[0].mxu0
    %v497 = vpop.f32.mrb[0].mxu0
    %v498 = vadd.f32 0.0, %v497
    %v499 = vpop.f32.mrb[0].mxu0
    %500 = vmatprep.mubr.bf16.mxu0 0
    %501 = vmatmul.mubr.bf16.gmra.mrb[0].mxu0 %v434
    %v502 = vpop.f32.mrb[0].mxu0
    %v503 = vadd.f32 0.0, %v502
    %v504 = vpop.f32.mrb[0].mxu0
    %v505 = vpop.f32.mrb[0].mxu0
    %v506 = vpop.f32.mrb[0].mxu0
    %507 = vdwg.mxu0
    %v508 = vadd.f32 %v330, %v471
    %v509 = vadd.f32 %v333, %v474
    %v510 = vadd.f32 %v338, %v479
    %v511 = vadd.f32 %v341, %v482
    %v512 = vadd.f32 %v346, %v487
    %v513 = vadd.f32 %v349, %v490
    %v514 = vadd.f32 %v354, %v495
    %v515 = vadd.f32 %v357, %v498
    %v516 = vadd.f32 %v362, %v503
    %v517 = vadd.f32 %v508, 3.0
    %v518 = vadd.f32 %v509, 3.0
    %v519 = vadd.f32 %v510, 3.0
    %v520 = vadd.f32 %v511, 3.0
    %v521 = vadd.f32 %v512, 3.0
    %v522 = vadd.f32 %v513, 3.0
    %v523 = vadd.f32 %v514, 3.0
    %v524 = vadd.f32 %v515, 3.0
    %v525 = vmax.f32 %v517, 0.0
    %v526 = vmax.f32 %v518, 0.0
    %v527 = vmax.f32 %v519, 0.0
    %v528 = vmax.f32 %v520, 0.0
    %v529 = vmax.f32 %v521, 0.0
    %v530 = vmax.f32 %v522, 0.0
    %v531 = vmax.f32 %v523, 0.0
    %v532 = vmax.f32 %v524, 0.0
    %v533 = vmin.f32 %v525, 6.0
    %v534 = vmin.f32 %v526, 6.0
    %v535 = vmin.f32 %v527, 6.0
    %v536 = vmin.f32 %v528, 6.0
    %v537 = vmin.f32 %v529, 6.0
    %v538 = vmin.f32 %v530, 6.0
    %v539 = vmin.f32 %v531, 6.0
    %v540 = vmin.f32 %v532, 6.0
    %v541 = vmul.f32 %v533, 0.16666667
    %v542 = vmul.f32 %v534, 0.16666667
    %v543 = vmul.f32 %v535, 0.16666667
    %v544 = vmul.f32 %v536, 0.16666667
    %v545 = vmul.f32 %v537, 0.16666667
    %v546 = vmul.f32 %v538, 0.16666667
    %v547 = vmul.f32 %v539, 0.16666667
    %v548 = vmul.f32 %v540, 0.16666667
    %v549 = vmul.f32 %v541, %v508
    %v550 = vmul.f32 %v542, %v509
    %v551 = vmul.f32 %v543, %v510
    %v552 = vmul.f32 %v544, %v511
    %v553 = vmul.f32 %v545, %v512
    %v554 = vmul.f32 %v546, %v513
    %v555 = vmul.f32 %v547, %v514
    %v556 = vmul.f32 %v548, %v515
    %v557 = vpack.c.bf16 %v550, %v549
    %v558 = vpack.c.bf16 %v552, %v551
    %v559 = vpack.c.bf16 %v554, %v553
    %v560 = vpack.c.bf16 %v556, %v555
    %v561 = vld [vmem:[%s6] sm:$0x1]
    %vm562 = vcmask 523264
    %v564 = vsel %vm562, %v561, 0
    %566 = vmatprep.subr.bf16.mxu0 0
    %567 = vmatpush1.bf16.msra.mxu0 %v557
    %568 = vmatprep.subr.bf16.mxu0 0
    %569 = vmatpush1.bf16.msra.mxu0 %v558
    %570 = vmatprep.subr.bf16.mxu0 0
    %571 = vmatpush1.bf16.msra.mxu0 %v559
    %572 = vmatprep.subr.bf16.mxu0 0
    %573 = vmatpush1.bf16.msra.mxu0 %v560
    %574 = vmatprep.subr.bf16.mxu0 0
    %575 = vmatpush1.bf16.msra.mxu0 0
    %576 = vmatprep.subr.bf16.mxu0 0
    %577 = vmatpush1.bf16.msra.mxu0 0
    %578 = vmatprep.subr.bf16.mxu0 0
    %579 = vmatpush1.bf16.msra.mxu0 0
    %580 = vmatprep.subr.bf16.mxu0 0
    %581 = vmatpush1.bf16.msra.mxu0 0
    %582 = vmatprep.subr.bf16.mxu0 0
    %583 = vmatpush1.bf16.msra.mxu0 0
    %584 = vmatprep.subr.bf16.mxu0 0
    %585 = vmatpush1.bf16.msra.mxu0 0
    %586 = vmatprep.subr.bf16.mxu0 0
    %587 = vmatpush1.bf16.msra.mxu0 0
    %588 = vmatprep.subr.bf16.mxu0 0
    %589 = vmatpush1.bf16.msra.mxu0 0
    %590 = vmatprep.subr.bf16.mxu0 0
    %591 = vmatpush1.bf16.msra.mxu0 0
    %592 = vmatprep.subr.bf16.mxu0 0
    %593 = vmatpush1.bf16.msra.mxu0 0
    %594 = vmatprep.subr.bf16.mxu0 0
    %595 = vmatpush1.bf16.msra.mxu0 0
    %596 = vmatprep.subr.bf16.mxu0 0
    %597 = vmatpush1.bf16.msra.mxu0 0
    %598 = vmatprep.mubr.bf16.mxu0 0
    %599 = vmatmul.mubr.bf16.gmra.mrb[0].mxu0 %v564
    %v600 = vpop.f32.mrb[0].mxu0
    %v601 = vadd.f32 0.0, %v600
    %v602 = vpop.f32.mrb[0].mxu0
    %v603 = vpop.f32.mrb[0].mxu0
    %v604 = vpop.f32.mrb[0].mxu0
    %605 = vdwg.mxu0
    %v606 = vadd.f32 %v516, %v601
    %vm607 = vcmask 9216
    %608 = vst.msk [vmem:[#allocation2] sm:$0x3] %vm607, %v606
    // Predicated region
    $region30: #{tpu_custom_call.1} parent=1 // pred_check
      _
    $region31: #{tpu_custom_call.1} parent=1 // pred_check_branch
      %610 = sbr.rel (0) target = $region33
    $region32: #{tpu_custom_call.1} parent=1 // pred_region
      %s612 = ssub.s32 32, 32
      %613 = vsyncadd [#allocation3], %s612
      %s615 = sshll.u32 [#allocation2], 4
      %s616 = int_to_ptr.vmem [resolvable:$true] %s615
      %618 = dma.vmem_to_hbm [thread:$0]  %s616, 32, %s7, [#allocation3]
    $region33: #{tpu_custom_call.1} parent=1 // pred_fallthru
      _
    // Predicated region
    $region34: #{tpu_custom_call.1} parent=1 // pred_check
      _
    $region35: #{tpu_custom_call.1} parent=1 // pred_check_branch
      %620 = sbr.rel (0) target = $region37
    $region36: #{tpu_custom_call.1} parent=1 // pred_region
      %621 = dma.done [#allocation3], 32
    $region37: #{tpu_custom_call.1} parent=1 // pred_fallthru
      _
    %622 = vsyncpa [#allocation3], 1

</llo_original>
